<compile_context>
chip_gen: v6e
topology: v6e:2x2x1
jax: 0.10.0
libtpu: 0.0.40
codegen_flags: <defaults>
</compile_context>

<pallas_src>
import jax
import jax.numpy as jnp
from jax.experimental import pallas as pl
from jax.experimental.pallas import tpu as pltpu

EPS = 1e-6
OUT_LANES = 128          # fc3 output padded to one full 128-lane tile


def _round_up(n, m):
    return ((n + m - 1) // m) * m


# ----------------------------------------------------------------------------
# Kernel: one batch tile  x (TB, W)  ->  out (TB, OUT_LANES)
# ----------------------------------------------------------------------------
def power_nn_kernel(x_ref, w1_ref, b1_ref, aw1_ref,
                    w2_ref, b2_ref, aw2_ref,
                    w3_ref, b3_ref, out_ref):
    x = x_ref[...]                                                   # (TB, W)

    # fc1 as a block-diagonal matmul: (TB, W) @ (W, W*H) -> (TB, W*H)
    z1 = jnp.dot(x, w1_ref[...], preferred_element_type=jnp.float32) + b1_ref[...]
    # act1: pow(|z|+eps, aw1);  pow(ab1, ab1) constant is folded into b2'
    h1 = jnp.power(jnp.abs(z1) + EPS, aw1_ref[...])                  # (TB, W*H)

    # fc2 as a block-diagonal matmul: (TB, W*H) @ (W*H, W*H)
    z2 = jnp.dot(h1, w2_ref[...], preferred_element_type=jnp.float32) + b2_ref[...]
    # act2: pow(|z|+eps, aw2);  pow(ab2, ab2) constant is folded into b3'
    h2 = jnp.power(jnp.abs(z2) + EPS, aw2_ref[...])                  # (TB, W*H)

    # fc3 (output padded to 128 lanes; padded columns of w3/b3 are zero)
    out_ref[...] = jnp.dot(h2, w3_ref[...],
                           preferred_element_type=jnp.float32) + b3_ref[...]


# ----------------------------------------------------------------------------
# Wrapper
# ----------------------------------------------------------------------------
def time_series_power_nn(x, prep, *, batch_tile=None):
    B, W = x.shape
    WH = prep["w2_blk"].shape[0]
    out_dim = prep["out_dim"]

    if batch_tile is None:
        # Large batches: 512-row tiles (multiple of 256, feeds the 256x256 MXU
        # with full-height LHS tiles and stays well under v7x's 32 MiB scoped
        # VMEM).  Small batches: round up to the (8, ...) sublane granule.
        batch_tile = 512 if B >= 512 else _round_up(B, 8)
    tb = batch_tile
    Bp = _round_up(B, tb)
    if Bp != B:
        x = jnp.pad(x, ((0, Bp - B), (0, 0)))

    const2 = lambda i: (0, 0)   # weights stay resident across the batch grid
    out = pl.pallas_call(
        power_nn_kernel,
        out_shape=jax.ShapeDtypeStruct((Bp, OUT_LANES), jnp.float32),
        grid=(Bp // tb,),
        in_specs=[
            pl.BlockSpec((tb, W), lambda i: (i, 0)),        # x
            pl.BlockSpec((W, WH), const2),                  # w1 block-diag
            pl.BlockSpec((1, WH), const2),                  # b1 tiled
            pl.BlockSpec((1, WH), const2),                  # aw1 tiled
            pl.BlockSpec((WH, WH), const2),                 # w2 block-diag
            pl.BlockSpec((1, WH), const2),                  # b2 fused
            pl.BlockSpec((1, WH), const2),                  # aw2 tiled
            pl.BlockSpec((WH, OUT_LANES), const2),          # w3 padded
            pl.BlockSpec((1, OUT_LANES), const2),           # b3 fused+padded
        ],
        out_specs=pl.BlockSpec((tb, OUT_LANES), lambda i: (i, 0)),
        compiler_params=pltpu.CompilerParams(
            dimension_semantics=("parallel",)),
    )(x, prep["w1_blk"], prep["b1_t"], prep["aw1_t"],
      prep["w2_blk"], prep["b2_fused"], prep["aw2_t"],
      prep["w3_pad"], prep["b3_fused"])

    return out[:B, :out_dim]


# ----------------------------------------------------------------------------
# Parameters
# ----------------------------------------------------------------------------
def init_params(key, window, hidden, out_dim=30):
    """Synthetic params mirroring the PyTorch __init__: xavier_uniform_
    weights, zero linear biases, ones for PowerBiasActivation (natural
    layouts: weights stored features-last / pre-transposed)."""
    k1, k2, k3 = jax.random.split(key, 3)

    def xavier(k, fan_in, fan_out, shape):
        bound = (6.0 / (fan_in + fan_out)) ** 0.5
        return jax.random.uniform(k, shape, jnp.float32, -bound, bound)

    return {
        "w1": xavier(k1, 1, hidden, (1, hidden)),            # Linear(1, H)
        "b1": jnp.zeros((1, hidden), jnp.float32),
        "aw1": jnp.ones((1, hidden), jnp.float32),
        "ab1": jnp.ones((1, hidden), jnp.float32),
        "w2": xavier(k2, hidden, hidden, (hidden, hidden)),   # Linear(H, H), (in, out)
        "b2": jnp.zeros((1, hidden), jnp.float32),
        "aw2": jnp.ones((1, hidden), jnp.float32),
        "ab2": jnp.ones((1, hidden), jnp.float32),
        "w3": xavier(k3, hidden * window, out_dim,
                     (hidden * window, out_dim)),             # Linear(W*H, 30), (in, out)
        "b3": jnp.zeros((1, out_dim), jnp.float32),
    }


def prepare_params(p, window):
    """Build kernel-ready tensors: block-diagonal fc1/fc2 weights, tiled
    activation weights, constants folded into downstream biases, and the
    output padded to 128 lanes.  Flattening order is w-major-then-h to match
    PyTorch's reshape(batch, -1)."""
    H = p["w1"].shape[-1]
    W = window
    WH = W * H
    out_dim = p["b3"].shape[-1]

    w1 = p["w1"].reshape(H)
    b1 = p["b1"].reshape(H)
    aw1 = p["aw1"].reshape(H)
    c1 = jnp.power(p["ab1"].reshape(H), p["ab1"].reshape(H))
    w2 = p["w2"]                      # (H, H), input-major
    b2 = p["b2"].reshape(H)
    aw2 = p["aw2"].reshape(H)
    c2 = jnp.power(p["ab2"].reshape(H), p["ab2"].reshape(H))
    w3 = p["w3"]                      # (W*H, out_dim)
    b3 = p["b3"].reshape(out_dim)

    eye_w = jnp.eye(W, dtype=jnp.float32)
    # fc1 block-diagonal: (W, W*H);  [w, w*H + j] = w1[j]
    w1_blk = (eye_w[:, :, None] * w1[None, None, :]).reshape(W, WH)
    # fc2 block-diagonal: (W*H, W*H);  [w*H + i, w*H + j] = w2[i, j]
    w2_blk = (eye_w[:, None, :, None] * w2[None, :, None, :]).reshape(WH, WH)

    b1_t = jnp.tile(b1, W)[None, :]                   # (1, WH)
    aw1_t = jnp.tile(aw1, W)[None, :]
    aw2_t = jnp.tile(aw2, W)[None, :]
    c1_t = jnp.tile(c1, W)                            # (WH,)
    c2_t = jnp.tile(c2, W)

    # Fold act1's "- pow(ab1, ab1)" into fc2's bias.
    b2_fused = (jnp.tile(b2, W) - c1_t @ w2_blk)[None, :]          # (1, WH)

    # Pad fc3 to 128 output lanes and fold act2's constant into its bias.
    w3_pad = jnp.pad(w3, ((0, 0), (0, OUT_LANES - out_dim)))        # (WH, 128)
    b3_pad = jnp.pad(b3, (0, OUT_LANES - out_dim))
    b3_fused = (b3_pad - c2_t @ w3_pad)[None, :]                    # (1, 128)

    return {
        "w1_blk": w1_blk, "b1_t": b1_t, "aw1_t": aw1_t,
        "w2_blk": w2_blk, "b2_fused": b2_fused, "aw2_t": aw2_t,
        "w3_pad": w3_pad, "b3_fused": b3_fused,
        "out_dim": out_dim,
    }


# ----------------------------------------------------------------------------
# Plain-JAX reference (matches the PyTorch forward exactly, natural params)
# ----------------------------------------------------------------------------
def reference_forward(x, p):
    B, W = x.shape
    h = x[..., None] * p["w1"][0] + p["b1"][0]                               # (B, W, H)
    h = jnp.power(jnp.abs(h) + EPS, p["aw1"][0]) - jnp.power(p["ab1"][0], p["ab1"][0])
    h = jnp.einsum("bwi,ij->bwj", h, p["w2"]) + p["b2"][0]
    h = jnp.power(jnp.abs(h) + EPS, p["aw2"][0]) - jnp.power(p["ab2"][0], p["ab2"][0])
    flat = h.reshape(B, -1)
    return flat @ p["w3"] + p["b3"][0]


if __name__ == "__main__":
    B, W, H = 4, 8, 32          # batch, input_window_size, hidden_size
    key = jax.random.PRNGKey(0)
    kx, kp = jax.random.split(key)
    x = jax.random.normal(kx, (B, W), jnp.float32)

    params = init_params(kp, W, H, out_dim=30)
    prep = prepare_params(params, W)

    out = jax.block_until_ready(time_series_power_nn(x, prep))
    ref = reference_forward(x, params)

    assert out.shape == (B, 30)
    max_err = jnp.max(jnp.abs(out - ref))
    assert jnp.allclose(out, ref, atol=1e-4, rtol=1e-4), f"max abs err {max_err}"
    print("KERNEL_OK")
</pallas_src>

<mosaic_0001>
module attributes {stable_mosaic.version = 11 : i64} {
  func.func @power_nn_kernel(%arg0: i32, %arg1: memref<8x8xf32, #tpu.memory_space<vmem>>, %arg2: memref<8x256xf32, #tpu.memory_space<vmem>>, %arg3: memref<1x256xf32, #tpu.memory_space<vmem>>, %arg4: memref<1x256xf32, #tpu.memory_space<vmem>>, %arg5: memref<256x256xf32, #tpu.memory_space<vmem>>, %arg6: memref<1x256xf32, #tpu.memory_space<vmem>>, %arg7: memref<1x256xf32, #tpu.memory_space<vmem>>, %arg8: memref<256x128xf32, #tpu.memory_space<vmem>>, %arg9: memref<1x128xf32, #tpu.memory_space<vmem>>, %arg10: memref<8x128xf32, #tpu.memory_space<vmem>>) attributes {dimension_semantics = [#tpu.dimension_semantics<parallel>], iteration_bounds = array<i64: 1>, scalar_prefetch = 0 : i64, scratch_operands = 0 : i64, tpu.core_type = #tpu.core_type<tc>, window_params = [{transform_indices = @transform_0, window_bounds = array<i64: 8, 8>}, {pipeline_mode = #tpu.pipeline_mode<synchronous>, transform_indices = @transform_1, window_bounds = array<i64: 8, 256>}, {pipeline_mode = #tpu.pipeline_mode<synchronous>, transform_indices = @transform_2, window_bounds = array<i64: 1, 256>}, {pipeline_mode = #tpu.pipeline_mode<synchronous>, transform_indices = @transform_3, window_bounds = array<i64: 1, 256>}, {pipeline_mode = #tpu.pipeline_mode<synchronous>, transform_indices = @transform_4, window_bounds = array<i64: 256, 256>}, {pipeline_mode = #tpu.pipeline_mode<synchronous>, transform_indices = @transform_5, window_bounds = array<i64: 1, 256>}, {pipeline_mode = #tpu.pipeline_mode<synchronous>, transform_indices = @transform_6, window_bounds = array<i64: 1, 256>}, {pipeline_mode = #tpu.pipeline_mode<synchronous>, transform_indices = @transform_7, window_bounds = array<i64: 256, 128>}, {pipeline_mode = #tpu.pipeline_mode<synchronous>, transform_indices = @transform_8, window_bounds = array<i64: 1, 128>}, {transform_indices = @transform_9, window_bounds = array<i64: 8, 128>}]} {
    %c0 = arith.constant 0 : index
    %c0_0 = arith.constant 0 : index
    %0 = vector.load %arg1[%c0, %c0_0] : memref<8x8xf32, #tpu.memory_space<vmem>>, vector<8x8xf32>
    %c0_1 = arith.constant 0 : index
    %c0_2 = arith.constant 0 : index
    %1 = vector.load %arg2[%c0_1, %c0_2] : memref<8x256xf32, #tpu.memory_space<vmem>>, vector<8x256xf32>
    %cst = arith.constant dense<0.000000e+00> : vector<8x256xf32>
    %2 = tpu.matmul %0, %1, %cst {dimension_numbers = #tpu.dot_dimension_numbers<[1], [0], [0], [1], [0, 0, 1, 1], [], []>} : vector<8x8xf32>, vector<8x256xf32>, vector<8x256xf32> -> vector<8x256xf32>
    %c0_3 = arith.constant 0 : index
    %c0_4 = arith.constant 0 : index
    %3 = vector.load %arg3[%c0_3, %c0_4] : memref<1x256xf32, #tpu.memory_space<vmem>>, vector<1x256xf32>
    %4 = vector.broadcast %3 : vector<1x256xf32> to vector<8x256xf32>
    %5 = arith.addf %2, %4 : vector<8x256xf32>
    %6 = math.absf %5 : vector<8x256xf32>
    %cst_5 = arith.constant 9.99999997E-7 : f32
    %7 = vector.broadcast %cst_5 : f32 to vector<8x256xf32>
    %8 = arith.addf %6, %7 : vector<8x256xf32>
    %c0_6 = arith.constant 0 : index
    %c0_7 = arith.constant 0 : index
    %9 = vector.load %arg4[%c0_6, %c0_7] : memref<1x256xf32, #tpu.memory_space<vmem>>, vector<1x256xf32>
    %10 = vector.broadcast %9 : vector<1x256xf32> to vector<8x256xf32>
    %11 = math.powf %8, %10 : vector<8x256xf32>
    %c0_8 = arith.constant 0 : index
    %c0_9 = arith.constant 0 : index
    %12 = vector.load %arg5[%c0_8, %c0_9] : memref<256x256xf32, #tpu.memory_space<vmem>>, vector<256x256xf32>
    %cst_10 = arith.constant dense<0.000000e+00> : vector<8x256xf32>
    %13 = tpu.matmul %11, %12, %cst_10 {dimension_numbers = #tpu.dot_dimension_numbers<[1], [0], [0], [1], [0, 0, 1, 1], [], []>} : vector<8x256xf32>, vector<256x256xf32>, vector<8x256xf32> -> vector<8x256xf32>
    %c0_11 = arith.constant 0 : index
    %c0_12 = arith.constant 0 : index
    %14 = vector.load %arg6[%c0_11, %c0_12] : memref<1x256xf32, #tpu.memory_space<vmem>>, vector<1x256xf32>
    %15 = vector.broadcast %14 : vector<1x256xf32> to vector<8x256xf32>
    %16 = arith.addf %13, %15 : vector<8x256xf32>
    %17 = math.absf %16 : vector<8x256xf32>
    %cst_13 = arith.constant 9.99999997E-7 : f32
    %18 = vector.broadcast %cst_13 : f32 to vector<8x256xf32>
    %19 = arith.addf %17, %18 : vector<8x256xf32>
    %c0_14 = arith.constant 0 : index
    %c0_15 = arith.constant 0 : index
    %20 = vector.load %arg7[%c0_14, %c0_15] : memref<1x256xf32, #tpu.memory_space<vmem>>, vector<1x256xf32>
    %21 = vector.broadcast %20 : vector<1x256xf32> to vector<8x256xf32>
    %22 = math.powf %19, %21 : vector<8x256xf32>
    %c0_16 = arith.constant 0 : index
    %c0_17 = arith.constant 0 : index
    %23 = vector.load %arg8[%c0_16, %c0_17] : memref<256x128xf32, #tpu.memory_space<vmem>>, vector<256x128xf32>
    %cst_18 = arith.constant dense<0.000000e+00> : vector<8x128xf32>
    %24 = tpu.matmul %22, %23, %cst_18 {dimension_numbers = #tpu.dot_dimension_numbers<[1], [0], [0], [1], [0, 0, 1, 1], [], []>} : vector<8x256xf32>, vector<256x128xf32>, vector<8x128xf32> -> vector<8x128xf32>
    %c0_19 = arith.constant 0 : index
    %c0_20 = arith.constant 0 : index
    %25 = vector.load %arg9[%c0_19, %c0_20] : memref<1x128xf32, #tpu.memory_space<vmem>>, vector<1x128xf32>
    %26 = vector.broadcast %25 : vector<1x128xf32> to vector<8x128xf32>
    %27 = arith.addf %24, %26 : vector<8x128xf32>
    %c0_21 = arith.constant 0 : index
    %c0_22 = arith.constant 0 : index
    %28 = vector.load %arg10[%c0_21, %c0_22] : memref<8x128xf32, #tpu.memory_space<vmem>>, vector<8x128xf32>
    tpu.vector_store %arg10[%c0_21, %c0_22], %27 {strides = array<i32>} : memref<8x128xf32, #tpu.memory_space<vmem>>, vector<8x128xf32>,
    return
  }
  func.func @transform_0(%arg0: i32) -> (i32, i32) {
    %c0_i32 = arith.constant 0 : i32
    %c0_i32_0 = arith.constant 0 : i32
    return %arg0, %c0_i32 : i32, i32
  }
  func.func @transform_1(%arg0: i32) -> (i32, i32) {
    %c0_i32 = arith.constant 0 : i32
    %c0_i32_0 = arith.constant 0 : i32
    %c0_i32_1 = arith.constant 0 : i32
    return %c0_i32, %c0_i32_0 : i32, i32
  }
  func.func @transform_2(%arg0: i32) -> (i32, i32) {
    %c0_i32 = arith.constant 0 : i32
    %c0_i32_0 = arith.constant 0 : i32
    %c0_i32_1 = arith.constant 0 : i32
    return %c0_i32, %c0_i32_0 : i32, i32
  }
  func.func @transform_3(%arg0: i32) -> (i32, i32) {
    %c0_i32 = arith.constant 0 : i32
    %c0_i32_0 = arith.constant 0 : i32
    %c0_i32_1 = arith.constant 0 : i32
    return %c0_i32, %c0_i32_0 : i32, i32
  }
  func.func @transform_4(%arg0: i32) -> (i32, i32) {
    %c0_i32 = arith.constant 0 : i32
    %c0_i32_0 = arith.constant 0 : i32
    %c0_i32_1 = arith.constant 0 : i32
    return %c0_i32, %c0_i32_0 : i32, i32
  }
  func.func @transform_5(%arg0: i32) -> (i32, i32) {
    %c0_i32 = arith.constant 0 : i32
    %c0_i32_0 = arith.constant 0 : i32
    %c0_i32_1 = arith.constant 0 : i32
    return %c0_i32, %c0_i32_0 : i32, i32
  }
  func.func @transform_6(%arg0: i32) -> (i32, i32) {
    %c0_i32 = arith.constant 0 : i32
    %c0_i32_0 = arith.constant 0 : i32
    %c0_i32_1 = arith.constant 0 : i32
    return %c0_i32, %c0_i32_0 : i32, i32
  }
  func.func @transform_7(%arg0: i32) -> (i32, i32) {
    %c0_i32 = arith.constant 0 : i32
    %c0_i32_0 = arith.constant 0 : i32
    %c0_i32_1 = arith.constant 0 : i32
    return %c0_i32, %c0_i32_0 : i32, i32
  }
  func.func @transform_8(%arg0: i32) -> (i32, i32) {
    %c0_i32 = arith.constant 0 : i32
    %c0_i32_0 = arith.constant 0 : i32
    %c0_i32_1 = arith.constant 0 : i32
    return %c0_i32, %c0_i32_0 : i32, i32
  }
  func.func @transform_9(%arg0: i32) -> (i32, i32) {
    %c0_i32 = arith.constant 0 : i32
    %c0_i32_0 = arith.constant 0 : i32
    return %arg0, %c0_i32 : i32, i32
  }
}

</mosaic_0001>

<llo_original>
// kernel: tpu_custom_call.1
$region0: #{tpu_custom_call.1}
  #allocation0 [shape = 'u32[]', space=smem, size = 0x4, offset = 0x4, fixed_abs, tag = 'smem constant byte address 0x4 - core index']
  #allocation1 [shape = 'u32[144,128]{1,0:T(1,128)}', space=vmem, size = 0x12000, scoped, tag = 'internal scratch']
  %s0 = inlined_call_operand.hbm [shape: f32[8,8], index: 0, kind: input, shape index: {}]
  %s1 = inlined_call_operand.hbm [shape: f32[8,256], index: 1, kind: input, shape index: {}]
  %s2 = inlined_call_operand.vmem [shape: f32[1,256], index: 2, kind: input, shape index: {}]
  %s3 = inlined_call_operand.vmem [shape: f32[1,256], index: 3, kind: input, shape index: {}]
  %s4 = inlined_call_operand.hbm [shape: f32[256,256], index: 4, kind: input, shape index: {}]
  %s5 = inlined_call_operand.vmem [shape: f32[1,256], index: 5, kind: input, shape index: {}]
  %s6 = inlined_call_operand.vmem [shape: f32[1,256], index: 6, kind: input, shape index: {}]
  %s7 = inlined_call_operand.hbm [shape: f32[256,128], index: 7, kind: input, shape index: {}]
  %s8 = inlined_call_operand.vmem [shape: f32[1,128], index: 8, kind: input, shape index: {}]
  %s9 = inlined_call_operand.hbm [shape: f32[8,128], index: 9, kind: output, shape index: {}]
  %s10 = sld [smem:[#allocation0]]
  $region62: #{tpu_custom_call.1} parent=0
    _
  %s12 = ssub.s32 1, %s10
  %s13 = scalar_select 0, %s12, %s10
  $region1: #{tpu_custom_call.1} parent=0
    #allocation2 [shape = 'u8[4096]{0}', space=vmem, size = 0x1000, scoped, tag = 'input window, operand 0, single buffered']
    #allocation3 [shape = 's32[1]{0}', space=sflag, size = 0x4, scoped, tag = 'scoped memory for tpu_custom_call.1']
    #allocation4 [shape = 's32[1]{0}', space=sflag, size = 0x4, scoped, tag = 'scoped memory for tpu_custom_call.1']
    #allocation5 [shape = 'u8[8192]{0}', space=vmem, size = 0x2000, scoped, tag = 'input window, operand 1, single buffered']
    #allocation6 [shape = 's32[1]{0}', space=sflag, size = 0x4, scoped, tag = 'scoped memory for tpu_custom_call.1']
    #allocation7 [shape = 'u8[262144]{0}', space=vmem, size = 0x40000, scoped, tag = 'input window, operand 4, single buffered']
    #allocation8 [shape = 'u8[131072]{0}', space=vmem, size = 0x20000, scoped, tag = 'input window, operand 7, single buffered']
    #allocation9 [shape = 's32[1]{0}', space=sflag, size = 0x4, scoped, tag = 'scoped memory for tpu_custom_call.1']
    #allocation10 [shape = 'u8[4096]{0}', space=vmem, size = 0x1000, scoped, tag = 'output window, operand 0, single buffered']
    %14 = vsyncpa [#allocation3], 0
    %15 = vsyncpa [#allocation6], 0
    %16 = vsyncpa [#allocation9], 0
    %17 = vsyncpa [#allocation4], 0
    // Predicated region
    $region2: #{tpu_custom_call.1} parent=1 // pred_check
      _
    $region3: #{tpu_custom_call.1} parent=1 // pred_check_branch
      %19 = sbr.rel (0) target = $region5
    $region4: #{tpu_custom_call.1} parent=1 // pred_region
      %s21 = ssub.s32 128, 128
      %22 = vsyncadd [#allocation3], %s21
      %s24 = sshll.u32 [#allocation2], 4
      %s25 = int_to_ptr.vmem [resolvable:$true] %s24
      %27 = dma.hbm_to_vmem [thread:$0]  %s0, 128, %s25, [#allocation3]
    $region5: #{tpu_custom_call.1} parent=1 // pred_fallthru
      _
    // Predicated region
    $region6: #{tpu_custom_call.1} parent=1 // pred_check
      _
    $region7: #{tpu_custom_call.1} parent=1 // pred_check_branch
      %29 = sbr.rel (0) target = $region9
    $region8: #{tpu_custom_call.1} parent=1 // pred_region
      %s31 = ssub.s32 256, 256
      %32 = vsyncadd [#allocation6], %s31
      %s34 = sshll.u32 [#allocation5], 4
      %s35 = int_to_ptr.vmem [resolvable:$true] %s34
      %37 = dma.hbm_to_vmem [thread:$0]  %s1, 256, %s35, [#allocation6]
    $region9: #{tpu_custom_call.1} parent=1 // pred_fallthru
      _
    // Predicated region
    $region10: #{tpu_custom_call.1} parent=1 // pred_check
      _
    $region11: #{tpu_custom_call.1} parent=1 // pred_check_branch
      %39 = sbr.rel (0) target = $region13
    $region12: #{tpu_custom_call.1} parent=1 // pred_region
      _
    $region13: #{tpu_custom_call.1} parent=1 // pred_fallthru
      _
    // Predicated region
    $region14: #{tpu_custom_call.1} parent=1 // pred_check
      _
    $region15: #{tpu_custom_call.1} parent=1 // pred_check_branch
      %41 = sbr.rel (0) target = $region17
    $region16: #{tpu_custom_call.1} parent=1 // pred_region
      _
    $region17: #{tpu_custom_call.1} parent=1 // pred_fallthru
      _
    // Predicated region
    $region18: #{tpu_custom_call.1} parent=1 // pred_check
      _
    $region19: #{tpu_custom_call.1} parent=1 // pred_check_branch
      %43 = sbr.rel (0) target = $region21
    $region20: #{tpu_custom_call.1} parent=1 // pred_region
      %s45 = ssub.s32 8192, 8192
      %46 = vsyncadd [#allocation6], %s45
      %s47 = sshll.u32 [#allocation7], 4
      %s48 = int_to_ptr.vmem [resolvable:$true] %s47
      %53 = dma.hbm_to_vmem [thread:$0]  %s4, 8192, %s48, [#allocation6], 256, 256, 16
    $region21: #{tpu_custom_call.1} parent=1 // pred_fallthru
      _
    // Predicated region
    $region22: #{tpu_custom_call.1} parent=1 // pred_check
      _
    $region23: #{tpu_custom_call.1} parent=1 // pred_check_branch
      %55 = sbr.rel (0) target = $region25
    $region24: #{tpu_custom_call.1} parent=1 // pred_region
      _
    $region25: #{tpu_custom_call.1} parent=1 // pred_fallthru
      _
    // Predicated region
    $region26: #{tpu_custom_call.1} parent=1 // pred_check
      _
    $region27: #{tpu_custom_call.1} parent=1 // pred_check_branch
      %57 = sbr.rel (0) target = $region29
    $region28: #{tpu_custom_call.1} parent=1 // pred_region
      _
    $region29: #{tpu_custom_call.1} parent=1 // pred_fallthru
      _
    // Predicated region
    $region30: #{tpu_custom_call.1} parent=1 // pred_check
      _
    $region31: #{tpu_custom_call.1} parent=1 // pred_check_branch
      %59 = sbr.rel (0) target = $region33
    $region32: #{tpu_custom_call.1} parent=1 // pred_region
      %s61 = ssub.s32 4096, 4096
      %62 = vsyncadd [#allocation9], %s61
      %s63 = sshll.u32 [#allocation8], 4
      %s64 = int_to_ptr.vmem [resolvable:$true] %s63
      %69 = dma.hbm_to_vmem [thread:$0]  %s7, 4096, %s64, [#allocation9], 128, 128, 8
    $region33: #{tpu_custom_call.1} parent=1 // pred_fallthru
      _
    // Predicated region
    $region34: #{tpu_custom_call.1} parent=1 // pred_check
      _
    $region35: #{tpu_custom_call.1} parent=1 // pred_check_branch
      %71 = sbr.rel (0) target = $region37
    $region36: #{tpu_custom_call.1} parent=1 // pred_region
      _
    $region37: #{tpu_custom_call.1} parent=1 // pred_fallthru
      _
    // Predicated region
    $region38: #{tpu_custom_call.1} parent=1 // pred_check
      _
    $region39: #{tpu_custom_call.1} parent=1 // pred_check_branch
      %73 = sbr.rel (0) target = $region41
    $region40: #{tpu_custom_call.1} parent=1 // pred_region
      %74 = dma.done [#allocation3], 128
    $region41: #{tpu_custom_call.1} parent=1 // pred_fallthru
      _
    // Predicated region
    $region42: #{tpu_custom_call.1} parent=1 // pred_check
      _
    $region43: #{tpu_custom_call.1} parent=1 // pred_check_branch
      %76 = sbr.rel (0) target = $region45
    $region44: #{tpu_custom_call.1} parent=1 // pred_region
      %77 = dma.done [#allocation6], 256
    $region45: #{tpu_custom_call.1} parent=1 // pred_fallthru
      _
    // Predicated region
    $region46: #{tpu_custom_call.1} parent=1 // pred_check
      _
    $region47: #{tpu_custom_call.1} parent=1 // pred_check_branch
      %79 = sbr.rel (0) target = $region49
    $region48: #{tpu_custom_call.1} parent=1 // pred_region
      %80 = dma.done [#allocation6], 8192
    $region49: #{tpu_custom_call.1} parent=1 // pred_fallthru
      _
    // Predicated region
    $region50: #{tpu_custom_call.1} parent=1 // pred_check
      _
    $region51: #{tpu_custom_call.1} parent=1 // pred_check_branch
      %82 = sbr.rel (0) target = $region53
    $region52: #{tpu_custom_call.1} parent=1 // pred_region
      %83 = dma.done [#allocation9], 4096
    $region53: #{tpu_custom_call.1} parent=1 // pred_fallthru
      _
    %v84 = vld [vmem:[#allocation2] sm:$0xff]
    %v85 = vld [vmem:[#allocation5] sm:$0xff]
    %v86 = vld [vmem:[#allocation5 + $0x8] sm:$0xff]
    %v87 = vld [vmem:[%s2] sm:$0x3]
    %v89 = vlaneseq
    %v90 = vshrl.u32 %v89, 7
    %v91 = vsub.s32 0, %v90
    %v92 = vrot.slane %v87, %v91
    %v93 = vlaneseq
    %v94 = vshrl.u32 %v93, 7
    %v95 = vsub.s32 1, %v94
    %v96 = vrot.slane %v87, %v95
    %vm99 = vcmask 64512
    %v101 = vsel %vm99, %v84, 0
    %103 = vmatprep.subr.mxu0 0.0
    %104 = vmatpush1.msra.mxu0 0.0
    %105 = vmatprep.subr.mxu0 0.0
    %106 = vmatpush1.msra.mxu0 0.0
    %107 = vmatprep.subr.mxu0 0.0
    %108 = vmatpush1.msra.mxu0 0.0
    %109 = vmatprep.subr.mxu0 0.0
    %110 = vmatpush1.msra.mxu0 0.0
    %111 = vmatprep.subr.mxu0 0.0
    %112 = vmatpush1.msra.mxu0 0.0
    %113 = vmatprep.subr.mxu0 0.0
    %114 = vmatpush1.msra.mxu0 0.0
    %115 = vmatprep.subr.mxu0 0.0
    %116 = vmatpush1.msra.mxu0 0.0
    %117 = vmatprep.subr.mxu0 0.0
    %118 = vmatpush1.msra.mxu0 0.0
    %119 = vmatprep.subr.mxu0 0.0
    %120 = vmatpush1.msra.mxu0 0.0
    %121 = vmatprep.subr.mxu0 0.0
    %122 = vmatpush1.msra.mxu0 0.0
    %123 = vmatprep.subr.mxu0 0.0
    %124 = vmatpush1.msra.mxu0 0.0
    %125 = vmatprep.subr.mxu0 0.0
    %126 = vmatpush1.msra.mxu0 0.0
    %127 = vmatprep.subr.mxu0 0.0
    %128 = vmatpush1.msra.mxu0 0.0
    %129 = vmatprep.subr.mxu0 0.0
    %130 = vmatpush1.msra.mxu0 0.0
    %131 = vmatprep.subr.mxu0 0.0
    %132 = vmatpush1.msra.mxu0 0.0
    %133 = vmatprep.subr.mxu0 %v86
    %134 = vmatpush1.msra.mxu0 %v85
    %135 = vmatprep.subr.mxu0 0.0
    %136 = vmatpush2.msra.mxu0 0.0
    %137 = vmatprep.subr.mxu0 0.0
    %138 = vmatpush2.msra.mxu0 0.0
    %139 = vmatprep.subr.mxu0 0.0
    %140 = vmatpush2.msra.mxu0 0.0
    %141 = vmatprep.subr.mxu0 0.0
    %142 = vmatpush2.msra.mxu0 0.0
    %143 = vmatprep.subr.mxu0 0.0
    %144 = vmatpush2.msra.mxu0 0.0
    %145 = vmatprep.subr.mxu0 0.0
    %146 = vmatpush2.msra.mxu0 0.0
    %147 = vmatprep.subr.mxu0 0.0
    %148 = vmatpush2.msra.mxu0 0.0
    %149 = vmatprep.subr.mxu0 0.0
    %150 = vmatpush2.msra.mxu0 0.0
    %151 = vmatprep.subr.mxu0 0.0
    %152 = vmatpush2.msra.mxu0 0.0
    %153 = vmatprep.subr.mxu0 0.0
    %154 = vmatpush2.msra.mxu0 0.0
    %155 = vmatprep.subr.mxu0 0.0
    %156 = vmatpush2.msra.mxu0 0.0
    %157 = vmatprep.subr.mxu0 0.0
    %158 = vmatpush2.msra.mxu0 0.0
    %159 = vmatprep.subr.mxu0 0.0
    %160 = vmatpush2.msra.mxu0 0.0
    %161 = vmatprep.subr.mxu0 0.0
    %162 = vmatpush2.msra.mxu0 0.0
    %163 = vmatprep.subr.mxu0 0.0
    %164 = vmatpush2.msra.mxu0 0.0
    %165 = vmatprep.subr.mxu0 0.0
    %166 = vmatpush2.msra.mxu0 0.0
    %167 = vmatprep.mubr.f32.mxu0 0.0
    %168 = vmatmul.mubr.f32.gmra.mxu0 %v101
    %v169 = vpop.f32.mrf.mxu0
    %v170 = vadd.f32 %v92, %v169
    %v171 = vpop.f32.mrf.mxu0
    %v172 = vadd.f32 %v96, %v171
    %173 = vdwg.mxu0
    %v174 = vand.u32 2147483647, %v170
    %v175 = vand.u32 2147483647, %v172
    %v176 = vadd.f32 %v174, 1e-06
    %v177 = vadd.f32 %v175, 1e-06
    %v178 = vld [vmem:[%s3] sm:$0x3]
    %v180 = vlaneseq
    %v181 = vshrl.u32 %v180, 7
    %v182 = vsub.s32 0, %v181
    %v183 = vrot.slane %v178, %v182
    %v184 = vlaneseq
    %v185 = vshrl.u32 %v184, 7
    %v186 = vsub.s32 1, %v185
    %v187 = vrot.slane %v178, %v186
    %v190 = vpow.f32 %v176, %v183
    %v191 = vpow.f32 %v177, %v187
    %v192 = vld [vmem:[#allocation7] sm:$0xff]
    %v193 = vld [vmem:[#allocation7 + $0x8] sm:$0xff]
    %v194 = vld [vmem:[#allocation7 + $0x10] sm:$0xff]
    %v195 = vld [vmem:[#allocation7 + $0x18] sm:$0xff]
    %v196 = vld [vmem:[#allocation7 + $0x20] sm:$0xff]
    %v197 = vld [vmem:[#allocation7 + $0x28] sm:$0xff]
    %v198 = vld [vmem:[#allocation7 + $0x30] sm:$0xff]
    %v199 = vld [vmem:[#allocation7 + $0x38] sm:$0xff]
    %v200 = vld [vmem:[#allocation7 + $0x40] sm:$0xff]
    %v201 = vld [vmem:[#allocation7 + $0x48] sm:$0xff]
    %v202 = vld [vmem:[#allocation7 + $0x50] sm:$0xff]
    %v203 = vld [vmem:[#allocation7 + $0x58] sm:$0xff]
    %v204 = vld [vmem:[#allocation7 + $0x60] sm:$0xff]
    %v205 = vld [vmem:[#allocation7 + $0x68] sm:$0xff]
    %v206 = vld [vmem:[#allocation7 + $0x70] sm:$0xff]
    %v207 = vld [vmem:[#allocation7 + $0x78] sm:$0xff]
    %v208 = vld [vmem:[#allocation7 + $0x80] sm:$0xff]
    %v209 = vld [vmem:[#allocation7 + $0x88] sm:$0xff]
    %v210 = vld [vmem:[#allocation7 + $0x90] sm:$0xff]
    %v211 = vld [vmem:[#allocation7 + $0x98] sm:$0xff]
    %v212 = vld [vmem:[#allocation7 + $0xa0] sm:$0xff]
    %v213 = vld [vmem:[#allocation7 + $0xa8] sm:$0xff]
    %v214 = vld [vmem:[#allocation7 + $0xb0] sm:$0xff]
    %v215 = vld [vmem:[#allocation7 + $0xb8] sm:$0xff]
    %v216 = vld [vmem:[#allocation7 + $0xc0] sm:$0xff]
    %v217 = vld [vmem:[#allocation7 + $0xc8] sm:$0xff]
    %v218 = vld [vmem:[#allocation7 + $0xd0] sm:$0xff]
    %v219 = vld [vmem:[#allocation7 + $0xd8] sm:$0xff]
    %v220 = vld [vmem:[#allocation7 + $0xe0] sm:$0xff]
    %v221 = vld [vmem:[#allocation7 + $0xe8] sm:$0xff]
    %v222 = vld [vmem:[#allocation7 + $0xf0] sm:$0xff]
    %v223 = vld [vmem:[#allocation7 + $0xf8] sm:$0xff]
    %v224 = vld [vmem:[#allocation7 + $0x100] sm:$0xff]
    %v225 = vld [vmem:[#allocation7 + $0x108] sm:$0xff]
    %v226 = vld [vmem:[#allocation7 + $0x110] sm:$0xff]
    %v227 = vld [vmem:[#allocation7 + $0x118] sm:$0xff]
    %v228 = vld [vmem:[#allocation7 + $0x120] sm:$0xff]
    %v229 = vld [vmem:[#allocation7 + $0x128] sm:$0xff]
    %v230 = vld [vmem:[#allocation7 + $0x130] sm:$0xff]
    %v231 = vld [vmem:[#allocation7 + $0x138] sm:$0xff]
    %v232 = vld [vmem:[#allocation7 + $0x140] sm:$0xff]
    %v233 = vld [vmem:[#allocation7 + $0x148] sm:$0xff]
    %v234 = vld [vmem:[#allocation7 + $0x150] sm:$0xff]
    %v235 = vld [vmem:[#allocation7 + $0x158] sm:$0xff]
    %v236 = vld [vmem:[#allocation7 + $0x160] sm:$0xff]
    %v237 = vld [vmem:[#allocation7 + $0x168] sm:$0xff]
    %v238 = vld [vmem:[#allocation7 + $0x170] sm:$0xff]
    %v239 = vld [vmem:[#allocation7 + $0x178] sm:$0xff]
    %v240 = vld [vmem:[#allocation7 + $0x180] sm:$0xff]
    %v241 = vld [vmem:[#allocation7 + $0x188] sm:$0xff]
    %v242 = vld [vmem:[#allocation7 + $0x190] sm:$0xff]
    %v243 = vld [vmem:[#allocation7 + $0x198] sm:$0xff]
    %v244 = vld [vmem:[#allocation7 + $0x1a0] sm:$0xff]
    %v245 = vld [vmem:[#allocation7 + $0x1a8] sm:$0xff]
    %v246 = vld [vmem:[#allocation7 + $0x1b0] sm:$0xff]
    %v247 = vld [vmem:[#allocation7 + $0x1b8] sm:$0xff]
    %v248 = vld [vmem:[#allocation7 + $0x1c0] sm:$0xff]
    %v249 = vld [vmem:[#allocation7 + $0x1c8] sm:$0xff]
    %v250 = vld [vmem:[#allocation7 + $0x1d0] sm:$0xff]
    %v251 = vld [vmem:[#allocation7 + $0x1d8] sm:$0xff]
    %v252 = vld [vmem:[#allocation7 + $0x1e0] sm:$0xff]
    %v253 = vld [vmem:[#allocation7 + $0x1e8] sm:$0xff]
    %v254 = vld [vmem:[#allocation7 + $0x1f0] sm:$0xff]
    %v255 = vld [vmem:[#allocation7 + $0x1f8] sm:$0xff]
    %v256 = vld [vmem:[%s5] sm:$0x3]
    %v258 = vlaneseq
    %v259 = vshrl.u32 %v258, 7
    %v260 = vsub.s32 0, %v259
    %v261 = vrot.slane %v256, %v260
    %v262 = vlaneseq
    %v263 = vshrl.u32 %v262, 7
    %v264 = vsub.s32 1, %v263
    %v265 = vrot.slane %v256, %v264
    %268 = vmatprep.subr.mxu0 %v223
    %269 = vmatpush1.msra.mxu0 %v222
    %270 = vmatprep.subr.mxu0 %v221
    %271 = vmatpush1.msra.mxu0 %v220
    %272 = vmatprep.subr.mxu0 %v219
    %273 = vmatpush1.msra.mxu0 %v218
    %274 = vmatprep.subr.mxu0 %v217
    %275 = vmatpush1.msra.mxu0 %v216
    %276 = vmatprep.subr.mxu0 %v215
    %277 = vmatpush1.msra.mxu0 %v214
    %278 = vmatprep.subr.mxu0 %v213
    %279 = vmatpush1.msra.mxu0 %v212
    %280 = vmatprep.subr.mxu0 %v211
    %281 = vmatpush1.msra.mxu0 %v210
    %282 = vmatprep.subr.mxu0 %v209
    %283 = vmatpush1.msra.mxu0 %v208
    %284 = vmatprep.subr.mxu0 %v207
    %285 = vmatpush1.msra.mxu0 %v206
    %286 = vmatprep.subr.mxu0 %v205
    %287 = vmatpush1.msra.mxu0 %v204
    %288 = vmatprep.subr.mxu0 %v203
    %289 = vmatpush1.msra.mxu0 %v202
    %290 = vmatprep.subr.mxu0 %v201
    %291 = vmatpush1.msra.mxu0 %v200
    %292 = vmatprep.subr.mxu0 %v199
    %293 = vmatpush1.msra.mxu0 %v198
    %294 = vmatprep.subr.mxu0 %v197
    %295 = vmatpush1.msra.mxu0 %v196
    %296 = vmatprep.subr.mxu0 %v195
    %297 = vmatpush1.msra.mxu0 %v194
    %298 = vmatprep.subr.mxu0 %v193
    %299 = vmatpush1.msra.mxu0 %v192
    %300 = vmatprep.subr.mxu0 %v255
    %301 = vmatpush2.msra.mxu0 %v254
    %302 = vmatprep.subr.mxu0 %v253
    %303 = vmatpush2.msra.mxu0 %v252
    %304 = vmatprep.subr.mxu0 %v251
    %305 = vmatpush2.msra.mxu0 %v250
    %306 = vmatprep.subr.mxu0 %v249
    %307 = vmatpush2.msra.mxu0 %v248
    %308 = vmatprep.subr.mxu0 %v247
    %309 = vmatpush2.msra.mxu0 %v246
    %310 = vmatprep.subr.mxu0 %v245
    %311 = vmatpush2.msra.mxu0 %v244
    %312 = vmatprep.subr.mxu0 %v243
    %313 = vmatpush2.msra.mxu0 %v242
    %314 = vmatprep.subr.mxu0 %v241
    %315 = vmatpush2.msra.mxu0 %v240
    %316 = vmatprep.subr.mxu0 %v239
    %317 = vmatpush2.msra.mxu0 %v238
    %318 = vmatprep.subr.mxu0 %v237
    %319 = vmatpush2.msra.mxu0 %v236
    %320 = vmatprep.subr.mxu0 %v235
    %321 = vmatpush2.msra.mxu0 %v234
    %322 = vmatprep.subr.mxu0 %v233
    %323 = vmatpush2.msra.mxu0 %v232
    %324 = vmatprep.subr.mxu0 %v231
    %325 = vmatpush2.msra.mxu0 %v230
    %326 = vmatprep.subr.mxu0 %v229
    %327 = vmatpush2.msra.mxu0 %v228
    %328 = vmatprep.subr.mxu0 %v227
    %329 = vmatpush2.msra.mxu0 %v226
    %330 = vmatprep.subr.mxu0 %v225
    %331 = vmatpush2.msra.mxu0 %v224
    %332 = vmatprep.mubr.f32.mxu0 %v191
    %333 = vmatmul.mubr.f32.gmra.mxu0 %v190
    %v334 = vpop.f32.mrf.mxu0
    %v335 = vadd.f32 %v261, %v334
    %v336 = vpop.f32.mrf.mxu0
    %v337 = vadd.f32 %v265, %v336
    %338 = vdwg.mxu0
    %v339 = vand.u32 2147483647, %v335
    %v340 = vand.u32 2147483647, %v337
    %v341 = vadd.f32 %v339, 1e-06
    %v342 = vadd.f32 %v340, 1e-06
    %v343 = vld [vmem:[%s6] sm:$0x3]
    %v345 = vlaneseq
    %v346 = vshrl.u32 %v345, 7
    %v347 = vsub.s32 0, %v346
    %v348 = vrot.slane %v343, %v347
    %v349 = vlaneseq
    %v350 = vshrl.u32 %v349, 7
    %v351 = vsub.s32 1, %v350
    %v352 = vrot.slane %v343, %v351
    %v355 = vpow.f32 %v341, %v348
    %v356 = vpow.f32 %v342, %v352
    %v357 = vld [vmem:[#allocation8] sm:$0xff]
    %v358 = vld [vmem:[#allocation8 + $0x8] sm:$0xff]
    %v359 = vld [vmem:[#allocation8 + $0x10] sm:$0xff]
    %v360 = vld [vmem:[#allocation8 + $0x18] sm:$0xff]
    %v361 = vld [vmem:[#allocation8 + $0x20] sm:$0xff]
    %v362 = vld [vmem:[#allocation8 + $0x28] sm:$0xff]
    %v363 = vld [vmem:[#allocation8 + $0x30] sm:$0xff]
    %v364 = vld [vmem:[#allocation8 + $0x38] sm:$0xff]
    %v365 = vld [vmem:[#allocation8 + $0x40] sm:$0xff]
    %v366 = vld [vmem:[#allocation8 + $0x48] sm:$0xff]
    %v367 = vld [vmem:[#allocation8 + $0x50] sm:$0xff]
    %v368 = vld [vmem:[#allocation8 + $0x58] sm:$0xff]
    %v369 = vld [vmem:[#allocation8 + $0x60] sm:$0xff]
    %v370 = vld [vmem:[#allocation8 + $0x68] sm:$0xff]
    %v371 = vld [vmem:[#allocation8 + $0x70] sm:$0xff]
    %v372 = vld [vmem:[#allocation8 + $0x78] sm:$0xff]
    %v373 = vld [vmem:[#allocation8 + $0x80] sm:$0xff]
    %v374 = vld [vmem:[#allocation8 + $0x88] sm:$0xff]
    %v375 = vld [vmem:[#allocation8 + $0x90] sm:$0xff]
    %v376 = vld [vmem:[#allocation8 + $0x98] sm:$0xff]
    %v377 = vld [vmem:[#allocation8 + $0xa0] sm:$0xff]
    %v378 = vld [vmem:[#allocation8 + $0xa8] sm:$0xff]
    %v379 = vld [vmem:[#allocation8 + $0xb0] sm:$0xff]
    %v380 = vld [vmem:[#allocation8 + $0xb8] sm:$0xff]
    %v381 = vld [vmem:[#allocation8 + $0xc0] sm:$0xff]
    %v382 = vld [vmem:[#allocation8 + $0xc8] sm:$0xff]
    %v383 = vld [vmem:[#allocation8 + $0xd0] sm:$0xff]
    %v384 = vld [vmem:[#allocation8 + $0xd8] sm:$0xff]
    %v385 = vld [vmem:[#allocation8 + $0xe0] sm:$0xff]
    %v386 = vld [vmem:[#allocation8 + $0xe8] sm:$0xff]
    %v387 = vld [vmem:[#allocation8 + $0xf0] sm:$0xff]
    %v388 = vld [vmem:[#allocation8 + $0xf8] sm:$0xff]
    %v389 = vld [vmem:[%s8] sm:$0x1]
    %v391 = vlaneseq
    %v392 = vshrl.u32 %v391, 7
    %v393 = vsub.s32 0, %v392
    %v394 = vrot.slane %v389, %v393
    %396 = vmatprep.subr.mxu0 0.0
    %397 = vmatpush1.msra.mxu0 %v372
    %398 = vmatprep.subr.mxu0 0.0
    %399 = vmatpush1.msra.mxu0 %v371
    %400 = vmatprep.subr.mxu0 0.0
    %401 = vmatpush1.msra.mxu0 %v370
    %402 = vmatprep.subr.mxu0 0.0
    %403 = vmatpush1.msra.mxu0 %v369
    %404 = vmatprep.subr.mxu0 0.0
    %405 = vmatpush1.msra.mxu0 %v368
    %406 = vmatprep.subr.mxu0 0.0
    %407 = vmatpush1.msra.mxu0 %v367
    %408 = vmatprep.subr.mxu0 0.0
    %409 = vmatpush1.msra.mxu0 %v366
    %410 = vmatprep.subr.mxu0 0.0
    %411 = vmatpush1.msra.mxu0 %v365
    %412 = vmatprep.subr.mxu0 0.0
    %413 = vmatpush1.msra.mxu0 %v364
    %414 = vmatprep.subr.mxu0 0.0
    %415 = vmatpush1.msra.mxu0 %v363
    %416 = vmatprep.subr.mxu0 0.0
    %417 = vmatpush1.msra.mxu0 %v362
    %418 = vmatprep.subr.mxu0 0.0
    %419 = vmatpush1.msra.mxu0 %v361
    %420 = vmatprep.subr.mxu0 0.0
    %421 = vmatpush1.msra.mxu0 %v360
    %422 = vmatprep.subr.mxu0 0.0
    %423 = vmatpush1.msra.mxu0 %v359
    %424 = vmatprep.subr.mxu0 0.0
    %425 = vmatpush1.msra.mxu0 %v358
    %426 = vmatprep.subr.mxu0 0.0
    %427 = vmatpush1.msra.mxu0 %v357
    %428 = vmatprep.subr.mxu0 0.0
    %429 = vmatpush2.msra.mxu0 %v388
    %430 = vmatprep.subr.mxu0 0.0
    %431 = vmatpush2.msra.mxu0 %v387
    %432 = vmatprep.subr.mxu0 0.0
    %433 = vmatpush2.msra.mxu0 %v386
    %434 = vmatprep.subr.mxu0 0.0
    %435 = vmatpush2.msra.mxu0 %v385
    %436 = vmatprep.subr.mxu0 0.0
    %437 = vmatpush2.msra.mxu0 %v384
    %438 = vmatprep.subr.mxu0 0.0
    %439 = vmatpush2.msra.mxu0 %v383
    %440 = vmatprep.subr.mxu0 0.0
    %441 = vmatpush2.msra.mxu0 %v382
    %442 = vmatprep.subr.mxu0 0.0
    %443 = vmatpush2.msra.mxu0 %v381
    %444 = vmatprep.subr.mxu0 0.0
    %445 = vmatpush2.msra.mxu0 %v380
    %446 = vmatprep.subr.mxu0 0.0
    %447 = vmatpush2.msra.mxu0 %v379
    %448 = vmatprep.subr.mxu0 0.0
    %449 = vmatpush2.msra.mxu0 %v378
    %450 = vmatprep.subr.mxu0 0.0
    %451 = vmatpush2.msra.mxu0 %v377
    %452 = vmatprep.subr.mxu0 0.0
    %453 = vmatpush2.msra.mxu0 %v376
    %454 = vmatprep.subr.mxu0 0.0
    %455 = vmatpush2.msra.mxu0 %v375
    %456 = vmatprep.subr.mxu0 0.0
    %457 = vmatpush2.msra.mxu0 %v374
    %458 = vmatprep.subr.mxu0 0.0
    %459 = vmatpush2.msra.mxu0 %v373
    %460 = vmatprep.mubr.f32.mxu0 %v356
    %461 = vmatmul.mubr.f32.gmra.mxu0 %v355
    %v462 = vpop.f32.mrf.mxu0
    %v463 = vadd.f32 %v394, %v462
    %v464 = vpop.f32.mrf.mxu0
    %465 = vdwg.mxu0
    %466 = vst [vmem:[#allocation10] sm:$0xff] %v463
    // Predicated region
    $region54: #{tpu_custom_call.1} parent=1 // pred_check
      _
    $region55: #{tpu_custom_call.1} parent=1 // pred_check_branch
      %468 = sbr.rel (0) target = $region57
    $region56: #{tpu_custom_call.1} parent=1 // pred_region
      %s470 = ssub.s32 128, 128
      %471 = vsyncadd [#allocation4], %s470
      %s473 = sshll.u32 [#allocation10], 4
      %s474 = int_to_ptr.vmem [resolvable:$true] %s473
      %476 = dma.vmem_to_hbm [thread:$0]  %s474, 128, %s9, [#allocation4]
    $region57: #{tpu_custom_call.1} parent=1 // pred_fallthru
      _
    // Predicated region
    $region58: #{tpu_custom_call.1} parent=1 // pred_check
      _
    $region59: #{tpu_custom_call.1} parent=1 // pred_check_branch
      %478 = sbr.rel (0) target = $region61
    $region60: #{tpu_custom_call.1} parent=1 // pred_region
      %479 = dma.done [#allocation4], 128
    $region61: #{tpu_custom_call.1} parent=1 // pred_fallthru
      _
    %480 = vsyncpa [#allocation3], 1
    %481 = vsyncpa [#allocation6], 1
    %482 = vsyncpa [#allocation9], 1
    %483 = vsyncpa [#allocation4], 1

</llo_original>
